<compile_context>
chip_gen: v7x
topology: tpu7x:2x2x1
jax: 0.10.0
libtpu: 0.0.40
codegen_flags: <defaults>
</compile_context>

<pallas_src>
import functools

import jax
import jax.numpy as jnp
from jax import lax
from jax.experimental import pallas as pl
from jax.experimental.pallas import tpu as pltpu

_NEG_PAD = -1e30  # finite "minus infinity": exp(_NEG_PAD - m) == 0 in f32


def _round_up(x, m):
    return ((x + m - 1) // m) * m


def _vmem_limit_bytes():
    # Generation-aware VMEM budget: ~3/4 of physical VMEM
    # (v5e/v6e: 128 MiB -> 96 MiB; v7x: 64 MiB -> 48 MiB).
    try:
        cap = getattr(pltpu.get_tpu_info(), "vmem_capacity_bytes", None)
        if cap:
            return int(min(cap * 3 // 4, 100 * 1024 * 1024))
    except Exception:
        pass
    return 64 * 1024 * 1024


def _bigram_kernel(it_ref, table_ref, *out_refs, emit_logits):
    if emit_logits:
        logits_ref, nll_ref = out_refs
    else:
        (nll_ref,) = out_refs

    it = it_ref[...]            # (TN, 2) int32: [:, 0] = idx, [:, 1] = targets
    table = table_ref[...]      # (Vp, Vp) f32, VMEM-resident, single-buffered

    tn = it.shape[0]
    vp = table.shape[1]

    idx = it[:, 0:1]            # (TN, 1)
    tgt = it[:, 1:2]            # (TN, 1)

    class_iota = lax.broadcasted_iota(jnp.int32, (tn, vp), 1)

    # --- embedding lookup as lane-dense one-hot matmul on the MXU ---
    # TODO(synk): switch to a scalar-prefetch row gather for V >= ~2K.
    onehot_idx = (idx == class_iota).astype(jnp.float32)                # (TN, Vp)
    logits = jnp.dot(onehot_idx, table,
                     preferred_element_type=jnp.float32)                # (TN, Vp)

    if emit_logits:
        logits_ref[...] = logits.astype(logits_ref.dtype)

    # --- per-row cross entropy (mean over rows is taken outside the kernel) ---
    m = jnp.max(logits, axis=-1, keepdims=True)                         # (TN, 1)
    shifted = logits - m                                                # (TN, Vp)
    lse = jnp.log(jnp.sum(jnp.exp(shifted), axis=-1, keepdims=True))    # (TN, 1)
    tgt_logit = jnp.sum(jnp.where(tgt == class_iota, shifted, 0.0),
                        axis=-1, keepdims=True)                         # (TN, 1)
    nll_ref[...] = lse - tgt_logit                                      # (TN, 1)


def bigram_forward(idx, table, targets=None, *, tile_rows=2048,
                   logits_dtype=jnp.float32, return_logits=True):
    """Mirror of BigramLanguageModel.forward.

    idx:     (B, T) int token ids
    table:   (V, V) float embedding table
    targets: (B, T) int or None
    return_logits=False gives a loss-only step (no logits HBM writeback).
    Returns (logits, loss) like the PyTorch module (logits is None when
    return_logits=False).
    """
    b, t = idx.shape
    v = table.shape[0]

    if targets is None:
        # Pure gather path (inference); plain JAX glue is fine here.
        return table[idx], None

    n = b * t
    v_pad = _round_up(v, 128)                      # lane-dense class axis

    # Row tile: multiple of 8; prefer a tile that divides N exactly so there is
    # no row padding and no post-kernel row slice/copy.
    tr = max(8, _round_up(int(tile_rows), 8))
    n8 = _round_up(n, 8)
    tn = min(tr, n8)
    if n == n8:
        while n % tn != 0:
            tn -= 8
    n_pad = _round_up(n, tn)
    n_steps = n_pad // tn

    # Merge idx and targets into one (N, 2) operand -> one DMA per grid step.
    it = jnp.stack([idx.reshape(n).astype(jnp.int32),
                    targets.reshape(n).astype(jnp.int32)], axis=1)
    if n_pad != n:
        it = jnp.pad(it, ((0, n_pad - n), (0, 0)))

    table_f32 = table.astype(jnp.float32)
    if v_pad != v:
        # Pad columns/rows with a large negative so softmax/logsumexp ignore them.
        table_p = jnp.full((v_pad, v_pad), _NEG_PAD, jnp.float32)
        table_p = table_p.at[:v, :v].set(table_f32)
    else:
        table_p = table_f32

    out_shape = []
    out_specs = []
    if return_logits:
        out_shape.append(jax.ShapeDtypeStruct((n_pad, v_pad), logits_dtype))
        out_specs.append(pl.BlockSpec((tn, v_pad), lambda i: (i, 0)))
    out_shape.append(jax.ShapeDtypeStruct((n_pad, 1), jnp.float32))
    out_specs.append(pl.BlockSpec((tn, 1), lambda i: (i, 0)))

    logits_bytes = (n_pad * v_pad * jnp.dtype(logits_dtype).itemsize
                    if return_logits else 0)
    cost = pl.CostEstimate(
        flops=2 * n_pad * v_pad * v_pad + 6 * n_pad * v_pad,
        transcendentals=n_pad * v_pad,
        bytes_accessed=(n_pad * 2 * 4          # merged idx/targets
                        + v_pad * v_pad * 4    # table (read once)
                        + n_pad * 4            # per-row NLL
                        + logits_bytes),       # optional logits writeback
    )

    outs = pl.pallas_call(
        functools.partial(_bigram_kernel, emit_logits=return_logits),
        out_shape=tuple(out_shape),
        grid_spec=pltpu.PrefetchScalarGridSpec(
            num_scalar_prefetch=0,
            grid=(n_steps,),
            in_specs=[
                # Merged (idx, targets) row tile.
                pl.BlockSpec((tn, 2), lambda i: (i, 0)),
                # Resident table: constant block index, single-buffered.
                pl.BlockSpec((v_pad, v_pad), lambda i: (0, 0),
                             pipeline_mode=pl.Buffered(1)),
            ],
            out_specs=tuple(out_specs),
        ),
        compiler_params=pltpu.CompilerParams(
            # No output is revisited across the row axis -> "parallel"
            # (shards row tiles across both TensorCores on v7x).
            dimension_semantics=("parallel",),
            vmem_limit_bytes=_vmem_limit_bytes(),
        ),
        cost_estimate=cost,
    )(it, table_p)

    if return_logits:
        logits_p, nll = outs
    else:
        (nll,) = outs

    nll_valid = nll[:, 0] if n_pad == n else nll[:n, 0]
    loss = jnp.mean(nll_valid)

    logits = None
    if return_logits:
        logits = logits_p
        # Padding is avoided when B*T is a multiple of 8 (rows) and the caller
        # passes a 128-multiple vocab (columns); slice only when present.
        if n_pad != n:
            logits = logits[:n]
        if v_pad != v:
            logits = logits[:, :v]
    return logits, loss


if __name__ == "__main__":
    # Small shapes consistent with the module: batch=2, seq=8, vocab=32.
    B, T, V = 2, 8, 32

    key = jax.random.PRNGKey(0)
    k_table, k_idx, k_tgt = jax.random.split(key, 3)

    # nn.Embedding default init is N(0, 1).
    table = jax.random.normal(k_table, (V, V), dtype=jnp.float32)
    idx = jax.random.randint(k_idx, (B, T), 0, V, dtype=jnp.int32)
    targets = jax.random.randint(k_tgt, (B, T), 0, V, dtype=jnp.int32)

    logits, loss = bigram_forward(idx, table, targets)
    jax.block_until_ready((logits, loss))

    # Reference check in plain JAX (same math as F.cross_entropy).
    ref_logits = table[idx].reshape(B * T, V)
    ref_loss = jnp.mean(
        jax.nn.logsumexp(ref_logits, axis=-1)
        - jnp.take_along_axis(ref_logits, targets.reshape(-1, 1), axis=-1)[:, 0]
    )
    assert logits.shape == (B * T, V)
    assert jnp.allclose(logits, ref_logits, atol=1e-5)
    assert jnp.allclose(loss, ref_loss, atol=1e-5)

    # Loss-only path (no logits writeback).
    none_logits, loss_only = bigram_forward(idx, table, targets,
                                            return_logits=False)
    jax.block_until_ready(loss_only)
    assert none_logits is None
    assert jnp.allclose(loss_only, ref_loss, atol=1e-5)

    # bf16-logits path (halves the logits HBM writeback).
    logits_bf16, loss_bf16 = bigram_forward(idx, table, targets,
                                            logits_dtype=jnp.bfloat16)
    jax.block_until_ready((logits_bf16, loss_bf16))
    assert logits_bf16.dtype == jnp.bfloat16
    assert jnp.allclose(logits_bf16.astype(jnp.float32), ref_logits, atol=2e-2)
    assert jnp.allclose(loss_bf16, ref_loss, atol=1e-5)

    # Inference path (targets=None) matches the module's (logits, None) contract.
    logits_only, no_loss = bigram_forward(idx, table, None)
    jax.block_until_ready(logits_only)
    assert no_loss is None and logits_only.shape == (B, T, V)

    print("KERNEL_OK")
</pallas_src>

<mosaic_0001>
module attributes {stable_mosaic.version = 11 : i64} {
  func.func @_bigram_kernel(%arg0: i32, %arg1: memref<16x2xi32, #tpu.memory_space<vmem>>, %arg2: memref<128x128xf32, #tpu.memory_space<vmem>>, %arg3: memref<16x128xf32, #tpu.memory_space<vmem>>, %arg4: memref<16x1xf32, #tpu.memory_space<vmem>>) attributes {dimension_semantics = [#tpu.dimension_semantics<parallel>], iteration_bounds = array<i64: 1>, scalar_prefetch = 0 : i64, scratch_operands = 0 : i64, tpu.core_type = #tpu.core_type<tc>, window_params = [{transform_indices = @transform_0, window_bounds = array<i64: 16, 2>}, {pipeline_mode = #tpu.pipeline_mode<synchronous>, transform_indices = @transform_1, window_bounds = array<i64: 128, 128>}, {transform_indices = @transform_2, window_bounds = array<i64: 16, 128>}, {transform_indices = @transform_3, window_bounds = array<i64: 16, 1>}]} {
    %c0 = arith.constant 0 : index
    %c0_0 = arith.constant 0 : index
    %0 = vector.load %arg1[%c0, %c0_0] : memref<16x2xi32, #tpu.memory_space<vmem>>, vector<16x2xi32>
    %c0_1 = arith.constant 0 : index
    %c0_2 = arith.constant 0 : index
    %1 = vector.load %arg2[%c0_1, %c0_2] : memref<128x128xf32, #tpu.memory_space<vmem>>, vector<128x128xf32>
    %2 = vector.extract_strided_slice %0 {offsets = [0, 0], sizes = [16, 1], strides = [1, 1]} : vector<16x2xi32> to vector<16x1xi32>
    %3 = vector.extract_strided_slice %0 {offsets = [0, 1], sizes = [16, 1], strides = [1, 1]} : vector<16x2xi32> to vector<16x1xi32>
    %4 = tpu.iota {dimensions = array<i32: 1>} : vector<16x128xi32>
    %5 = vector.broadcast %2 : vector<16x1xi32> to vector<16x128xi32>
    %6 = arith.cmpi eq, %5, %4 : vector<16x128xi32>
    %7 = arith.extui %6 : vector<16x128xi1> to vector<16x128xi32>
    %8 = arith.sitofp %7 : vector<16x128xi32> to vector<16x128xf32>
    %cst = arith.constant dense<0.000000e+00> : vector<16x128xf32>
    %9 = tpu.matmul %8, %1, %cst {dimension_numbers = #tpu.dot_dimension_numbers<[1], [0], [0], [1], [0, 0, 1, 1], [], []>} : vector<16x128xf32>, vector<128x128xf32>, vector<16x128xf32> -> vector<16x128xf32>
    %c0_3 = arith.constant 0 : index
    %c0_4 = arith.constant 0 : index
    %10 = vector.load %arg3[%c0_3, %c0_4] : memref<16x128xf32, #tpu.memory_space<vmem>>, vector<16x128xf32>
    tpu.vector_store %arg3[%c0_3, %c0_4], %9 {strides = array<i32>} : memref<16x128xf32, #tpu.memory_space<vmem>>, vector<16x128xf32>,
    %cst_5 = arith.constant dense<0xFF800000> : vector<16xf32>
    %11 = vector.multi_reduction <maximumf>, %9, %cst_5 [1] : vector<16x128xf32> to vector<16xf32>
    %12 = vector.shape_cast %11 : vector<16xf32> to vector<16x1xf32>
    %13 = vector.broadcast %12 : vector<16x1xf32> to vector<16x128xf32>
    %14 = arith.subf %9, %13 : vector<16x128xf32>
    %15 = math.exp %14 : vector<16x128xf32>
    %cst_6 = arith.constant dense<0.000000e+00> : vector<16xf32>
    %16 = vector.multi_reduction <add>, %15, %cst_6 [1] : vector<16x128xf32> to vector<16xf32>
    %17 = vector.shape_cast %16 : vector<16xf32> to vector<16x1xf32>
    %18 = math.log %17 : vector<16x1xf32>
    %19 = vector.broadcast %3 : vector<16x1xi32> to vector<16x128xi32>
    %20 = arith.cmpi eq, %19, %4 : vector<16x128xi32>
    %cst_7 = arith.constant 0.000000e+00 : f32
    %21 = vector.broadcast %cst_7 : f32 to vector<16x128xf32>
    %22 = arith.select %20, %14, %21 : vector<16x128xi1>, vector<16x128xf32>
    %cst_8 = arith.constant dense<0.000000e+00> : vector<16xf32>
    %23 = vector.multi_reduction <add>, %22, %cst_8 [1] : vector<16x128xf32> to vector<16xf32>
    %24 = vector.shape_cast %23 : vector<16xf32> to vector<16x1xf32>
    %25 = arith.subf %18, %24 : vector<16x1xf32>
    %c0_9 = arith.constant 0 : index
    %c0_10 = arith.constant 0 : index
    %26 = vector.load %arg4[%c0_9, %c0_10] : memref<16x1xf32, #tpu.memory_space<vmem>>, vector<16x1xf32>
    tpu.vector_store %arg4[%c0_9, %c0_10], %25 {strides = array<i32>} : memref<16x1xf32, #tpu.memory_space<vmem>>, vector<16x1xf32>,
    return
  }
  func.func @transform_0(%arg0: i32) -> (i32, i32) {
    %c0_i32 = arith.constant 0 : i32
    %c0_i32_0 = arith.constant 0 : i32
    return %arg0, %c0_i32 : i32, i32
  }
  func.func @transform_1(%arg0: i32) -> (i32, i32) {
    %c0_i32 = arith.constant 0 : i32
    %c0_i32_0 = arith.constant 0 : i32
    %c0_i32_1 = arith.constant 0 : i32
    return %c0_i32, %c0_i32_0 : i32, i32
  }
  func.func @transform_2(%arg0: i32) -> (i32, i32) {
    %c0_i32 = arith.constant 0 : i32
    %c0_i32_0 = arith.constant 0 : i32
    return %arg0, %c0_i32 : i32, i32
  }
  func.func @transform_3(%arg0: i32) -> (i32, i32) {
    %c0_i32 = arith.constant 0 : i32
    %c0_i32_0 = arith.constant 0 : i32
    return %arg0, %c0_i32 : i32, i32
  }
}

</mosaic_0001>

<llo_original>
// kernel: tpu_custom_call.1
$region0: #{tpu_custom_call.1}
  #allocation0 [shape = 'u32[]', space=smem, size = 0x4, offset = 0x4, fixed_abs, tag = 'smem constant byte address 0x4 - core index']
  #allocation1 [shape = 'u32[144,128]{1,0:T(1,128)}', space=vmem, size = 0x12000, scoped, tag = 'internal scratch']
  %s0 = inlined_call_operand.hbm [shape: s32[16,2], index: 0, kind: input, shape index: {}]
  %s1 = inlined_call_operand.hbm [shape: f32[128,128], index: 1, kind: input, shape index: {}]
  %s2 = inlined_call_operand.hbm [shape: f32[16,128], index: 2, kind: output, shape index: {0}]
  %s3 = inlined_call_operand.hbm [shape: f32[16,1], index: 3, kind: output, shape index: {1}]
  %4 = xla_tuple %s2, %s3
  %s5 = sld [smem:[#allocation0]]
  $region34: #{tpu_custom_call.1} parent=0
    _
  %s7 = ssub.s32 1, %s5
  %s8 = scalar_select 0, %s7, %s5
  $region1: #{tpu_custom_call.1} parent=0
    #allocation2 [shape = 'u8[8192]{0}', space=vmem, size = 0x2000, scoped, tag = 'input window, operand 0, single buffered']
    #allocation3 [shape = 's32[1]{0}', space=sflag, size = 0x4, scoped, tag = 'scoped memory for tpu_custom_call.1']
    #allocation4 [shape = 's32[1]{0}', space=sflag, size = 0x4, scoped, tag = 'scoped memory for tpu_custom_call.1']
    #allocation5 [shape = 'u8[65536]{0}', space=vmem, size = 0x10000, scoped, tag = 'input window, operand 1, single buffered']
    #allocation6 [shape = 's32[1]{0}', space=sflag, size = 0x4, scoped, tag = 'scoped memory for tpu_custom_call.1']
    #allocation7 [shape = 'u8[8192]{0}', space=vmem, size = 0x2000, scoped, tag = 'output window, operand 0, single buffered']
    #allocation8 [shape = 'u8[8192]{0}', space=vmem, size = 0x2000, scoped, tag = 'output window, operand 1, single buffered']
    #allocation9 [shape = 's32[1]{0}', space=sflag, size = 0x4, scoped, tag = 'scoped memory for tpu_custom_call.1']
    %9 = vsyncpa [#allocation3], 0
    %10 = vsyncpa [#allocation6], 0
    %11 = vsyncpa [#allocation4], 0
    %12 = vsyncpa [#allocation9], 0
    // Predicated region
    $region2: #{tpu_custom_call.1} parent=1 // pred_check
      _
    $region3: #{tpu_custom_call.1} parent=1 // pred_check_branch
      %14 = sbr.rel (0) target = $region5
    $region4: #{tpu_custom_call.1} parent=1 // pred_region
      %s16 = ssub.s32 256, 256
      %17 = vsyncadd [#allocation3], %s16
      %s18 = sshll.u32 [#allocation2], 4
      %s19 = int_to_ptr.vmem [resolvable:$true] %s18
      %24 = dma.hbm_to_vmem [thread:$0]  %s0, 256, %s19, [#allocation3], 128, 128, 8
    $region5: #{tpu_custom_call.1} parent=1 // pred_fallthru
      _
    // Predicated region
    $region6: #{tpu_custom_call.1} parent=1 // pred_check
      _
    $region7: #{tpu_custom_call.1} parent=1 // pred_check_branch
      %26 = sbr.rel (0) target = $region9
    $region8: #{tpu_custom_call.1} parent=1 // pred_region
      %s28 = ssub.s32 2048, 2048
      %29 = vsyncadd [#allocation6], %s28
      %s30 = sshll.u32 [#allocation5], 4
      %s31 = int_to_ptr.vmem [resolvable:$true] %s30
      %36 = dma.hbm_to_vmem [thread:$0]  %s1, 2048, %s31, [#allocation6], 128, 128, 8
    $region9: #{tpu_custom_call.1} parent=1 // pred_fallthru
      _
    // Predicated region
    $region10: #{tpu_custom_call.1} parent=1 // pred_check
      _
    $region11: #{tpu_custom_call.1} parent=1 // pred_check_branch
      %38 = sbr.rel (0) target = $region13
    $region12: #{tpu_custom_call.1} parent=1 // pred_region
      %39 = dma.done [#allocation3], 256
    $region13: #{tpu_custom_call.1} parent=1 // pred_fallthru
      _
    // Predicated region
    $region14: #{tpu_custom_call.1} parent=1 // pred_check
      _
    $region15: #{tpu_custom_call.1} parent=1 // pred_check_branch
      %41 = sbr.rel (0) target = $region17
    $region16: #{tpu_custom_call.1} parent=1 // pred_region
      %42 = dma.done [#allocation6], 2048
    $region17: #{tpu_custom_call.1} parent=1 // pred_fallthru
      _
    %v43 = vld [vmem:[#allocation2] sm:$0xff]
    %v44 = vld [vmem:[#allocation2 + $0x8] sm:$0xff]
    %v45 = vld [vmem:[#allocation5] sm:$0xff]
    %v46 = vld [vmem:[#allocation5 + $0x8] sm:$0xff]
    %v47 = vld [vmem:[#allocation5 + $0x10] sm:$0xff]
    %v48 = vld [vmem:[#allocation5 + $0x18] sm:$0xff]
    %v49 = vld [vmem:[#allocation5 + $0x20] sm:$0xff]
    %v50 = vld [vmem:[#allocation5 + $0x28] sm:$0xff]
    %v51 = vld [vmem:[#allocation5 + $0x30] sm:$0xff]
    %v52 = vld [vmem:[#allocation5 + $0x38] sm:$0xff]
    %v53 = vld [vmem:[#allocation5 + $0x40] sm:$0xff]
    %v54 = vld [vmem:[#allocation5 + $0x48] sm:$0xff]
    %v55 = vld [vmem:[#allocation5 + $0x50] sm:$0xff]
    %v56 = vld [vmem:[#allocation5 + $0x58] sm:$0xff]
    %v57 = vld [vmem:[#allocation5 + $0x60] sm:$0xff]
    %v58 = vld [vmem:[#allocation5 + $0x68] sm:$0xff]
    %v59 = vld [vmem:[#allocation5 + $0x70] sm:$0xff]
    %v60 = vld [vmem:[#allocation5 + $0x78] sm:$0xff]
    %v61 = vlaneseq
    %v62 = vand.u32 %v61, 127
    %63 = vset.pattern.permute.xlu0 0
    %64 = vperm.xlu0 %63, %v43
    %v65 = vpop.permute.xlu0 %64
    %66 = vset.pattern.permute.xlu0 0
    %67 = vperm.xlu0 %66, %v44
    %v68 = vpop.permute.xlu0 %67
    %vm69 = vcmp.eq.s32.totalorder %v65, %v62
    %vm70 = vcmp.eq.s32.totalorder %v68, %v62
    %v71 = vsel %vm69, 1, 0
    %v72 = vsel %vm70, 1, 0
    %v73 = vcvt.s32.f32 %v71
    %v74 = vcvt.s32.f32 %v72
    %75 = vmatprep.subr.mxu0 0.0
    %76 = vmatpush1.msra.mxu0 %v45
    %77 = vmatprep.subr.mxu0 0.0
    %78 = vmatpush1.msra.mxu0 %v46
    %79 = vmatprep.subr.mxu0 0.0
    %80 = vmatpush1.msra.mxu0 %v47
    %81 = vmatprep.subr.mxu0 0.0
    %82 = vmatpush1.msra.mxu0 %v48
    %83 = vmatprep.subr.mxu0 0.0
    %84 = vmatpush1.msra.mxu0 %v49
    %85 = vmatprep.subr.mxu0 0.0
    %86 = vmatpush1.msra.mxu0 %v50
    %87 = vmatprep.subr.mxu0 0.0
    %88 = vmatpush1.msra.mxu0 %v51
    %89 = vmatprep.subr.mxu0 0.0
    %90 = vmatpush1.msra.mxu0 %v52
    %91 = vmatprep.subr.mxu0 0.0
    %92 = vmatpush1.msra.mxu0 %v53
    %93 = vmatprep.subr.mxu0 0.0
    %94 = vmatpush1.msra.mxu0 %v54
    %95 = vmatprep.subr.mxu0 0.0
    %96 = vmatpush1.msra.mxu0 %v55
    %97 = vmatprep.subr.mxu0 0.0
    %98 = vmatpush1.msra.mxu0 %v56
    %99 = vmatprep.subr.mxu0 0.0
    %100 = vmatpush1.msra.mxu0 %v57
    %101 = vmatprep.subr.mxu0 0.0
    %102 = vmatpush1.msra.mxu0 %v58
    %103 = vmatprep.subr.mxu0 0.0
    %104 = vmatpush1.msra.mxu0 %v59
    %105 = vmatprep.subr.mxu0 0.0
    %106 = vmatpush1.msra.mxu0 %v60
    %107 = vmatprep.subr.mxu0 0.0
    %108 = vmatpush1.msra.mxu0 0.0
    %109 = vmatprep.subr.mxu0 0.0
    %110 = vmatpush1.msra.mxu0 0.0
    %111 = vmatprep.subr.mxu0 0.0
    %112 = vmatpush1.msra.mxu0 0.0
    %113 = vmatprep.subr.mxu0 0.0
    %114 = vmatpush1.msra.mxu0 0.0
    %115 = vmatprep.subr.mxu0 0.0
    %116 = vmatpush1.msra.mxu0 0.0
    %117 = vmatprep.subr.mxu0 0.0
    %118 = vmatpush1.msra.mxu0 0.0
    %119 = vmatprep.subr.mxu0 0.0
    %120 = vmatpush1.msra.mxu0 0.0
    %121 = vmatprep.subr.mxu0 0.0
    %122 = vmatpush1.msra.mxu0 0.0
    %123 = vmatprep.subr.mxu0 0.0
    %124 = vmatpush1.msra.mxu0 0.0
    %125 = vmatprep.subr.mxu0 0.0
    %126 = vmatpush1.msra.mxu0 0.0
    %127 = vmatprep.subr.mxu0 0.0
    %128 = vmatpush1.msra.mxu0 0.0
    %129 = vmatprep.subr.mxu0 0.0
    %130 = vmatpush1.msra.mxu0 0.0
    %131 = vmatprep.subr.mxu0 0.0
    %132 = vmatpush1.msra.mxu0 0.0
    %133 = vmatprep.subr.mxu0 0.0
    %134 = vmatpush1.msra.mxu0 0.0
    %135 = vmatprep.subr.mxu0 0.0
    %136 = vmatpush1.msra.mxu0 0.0
    %137 = vmatprep.subr.mxu0 0.0
    %138 = vmatpush1.msra.mxu0 0.0
    %139 = vmatprep.mubr.f32.mxu0 0.0
    %140 = vmatmul.mubr.f32.gmra.mrb[0].mxu0 %v73
    %v141 = vpop.f32.mrb[0].mxu0
    %v142 = vadd.f32 0.0, %v141
    %v143 = vpop.f32.mrb[0].mxu0
    %144 = vmatprep.mubr.f32.mxu0 0.0
    %145 = vmatmul.mubr.f32.gmra.mrb[0].mxu0 %v74
    %v146 = vpop.f32.mrb[0].mxu0
    %v147 = vadd.f32 0.0, %v146
    %v148 = vpop.f32.mrb[0].mxu0
    %149 = vdwg.mxu0
    %150 = vst [vmem:[#allocation7] sm:$0xff] %v142
    %151 = vst [vmem:[#allocation7 + $0x8] sm:$0xff] %v147
    %152 = vmax.xlane.f32.xlu0 %v142
    %v153 = vpop.xlane.xlu0 %152
    %154 = vmax.xlane.f32.xlu0 %v147
    %v155 = vpop.xlane.xlu0 %154
    %v156 = vsub.f32 %v142, %v153
    %v157 = vsub.f32 %v147, %v155
    %v158 = vmul.f32 %v156, 1.442695
    %v159 = vpow.pop %v158
    %v160 = vmul.f32 %v157, 1.442695
    %v161 = vpow.pop %v160
    %162 = vadd.xlane.f32.xlu0 %v159
    %v163 = vpop.xlane.xlu0 %162
    %164 = vadd.xlane.f32.xlu0 %v161
    %v165 = vpop.xlane.xlu0 %164
    %v166 = vlog2.pop %v163
    %v167 = vmul.f32 %v166, 0.6931472
    %v168 = vlog2.pop %v165
    %v169 = vmul.f32 %v168, 0.6931472
    %170 = vset.pattern.permute.xlu0 1
    %171 = vperm.xlu0 %170, %v43
    %v172 = vpop.permute.xlu0 %171
    %173 = vset.pattern.permute.xlu0 1
    %174 = vperm.xlu0 %173, %v44
    %v175 = vpop.permute.xlu0 %174
    %vm176 = vcmp.eq.s32.totalorder %v172, %v62
    %vm177 = vcmp.eq.s32.totalorder %v175, %v62
    %v178 = vsel %vm176, %v156, 0.0
    %v179 = vsel %vm177, %v157, 0.0
    %180 = vadd.xlane.f32.xlu0 %v178
    %v181 = vpop.xlane.xlu0 %180
    %182 = vadd.xlane.f32.xlu0 %v179
    %v183 = vpop.xlane.xlu0 %182
    %v184 = vsub.f32 %v167, %v181
    %v185 = vsub.f32 %v169, %v183
    %vm186 = vcmask 7168
    %187 = vst.msk [vmem:[#allocation8] sm:$0xff] %vm186, %v184
    %188 = vst.msk [vmem:[#allocation8 + $0x8] sm:$0xff] %vm186, %v185
    // Predicated region
    $region18: #{tpu_custom_call.1} parent=1 // pred_check
      _
    $region19: #{tpu_custom_call.1} parent=1 // pred_check_branch
      %190 = sbr.rel (0) target = $region21
    $region20: #{tpu_custom_call.1} parent=1 // pred_region
      %s192 = ssub.s32 256, 256
      %193 = vsyncadd [#allocation4], %s192
      %s194 = sshll.u32 [#allocation7], 4
      %s195 = int_to_ptr.vmem [resolvable:$true] %s194
      %200 = dma.vmem_to_hbm [thread:$0]  %s195, 256, %s2, [#allocation4], 128, 128, 8
    $region21: #{tpu_custom_call.1} parent=1 // pred_fallthru
      _
    // Predicated region
    $region22: #{tpu_custom_call.1} parent=1 // pred_check
      _
    $region23: #{tpu_custom_call.1} parent=1 // pred_check_branch
      %202 = sbr.rel (0) target = $region25
    $region24: #{tpu_custom_call.1} parent=1 // pred_region
      %s204 = ssub.s32 256, 256
      %205 = vsyncadd [#allocation9], %s204
      %s206 = sshll.u32 [#allocation8], 4
      %s207 = int_to_ptr.vmem [resolvable:$true] %s206
      %212 = dma.vmem_to_hbm [thread:$0]  %s207, 256, %s3, [#allocation9], 128, 128, 8
    $region25: #{tpu_custom_call.1} parent=1 // pred_fallthru
      _
    // Predicated region
    $region26: #{tpu_custom_call.1} parent=1 // pred_check
      _
    $region27: #{tpu_custom_call.1} parent=1 // pred_check_branch
      %214 = sbr.rel (0) target = $region29
    $region28: #{tpu_custom_call.1} parent=1 // pred_region
      %215 = dma.done [#allocation4], 256
    $region29: #{tpu_custom_call.1} parent=1 // pred_fallthru
      _
    // Predicated region
    $region30: #{tpu_custom_call.1} parent=1 // pred_check
      _
    $region31: #{tpu_custom_call.1} parent=1 // pred_check_branch
      %217 = sbr.rel (0) target = $region33
    $region32: #{tpu_custom_call.1} parent=1 // pred_region
      %218 = dma.done [#allocation9], 256
    $region33: #{tpu_custom_call.1} parent=1 // pred_fallthru
      _
    %219 = vsyncpa [#allocation3], 1
    %220 = vsyncpa [#allocation6], 1
    %221 = vsyncpa [#allocation4], 1
    %222 = vsyncpa [#allocation9], 1

</llo_original>
